<compile_context>
chip_gen: v5e
topology: v5e:2x2
jax: 0.10.0
libtpu: 0.0.40
codegen_flags: <defaults>
</compile_context>

<pallas_src>
import jax
import jax.numpy as jnp
from jax.experimental import pallas as pl
from jax.experimental.pallas import tpu as pltpu

_LANES = 128  # vreg lane width -> lane-dense, unmasked vector stores


def _default_block_bytes():
    """Per-buffer block size, tuned per TPU generation (conservative default)."""
    try:
        kind = jax.devices()[0].device_kind.lower()
    except Exception:  # pragma: no cover - defensive
        kind = ""
    # v6e/v7x: 32 MiB default scoped VMEM + fast HBM -> 4 MiB blocks
    # (in+out, double-buffered = 16 MiB VMEM).  v5e / unknown: 2 MiB blocks
    # (= 8 MiB VMEM, under the 16 MiB scoped default and already near roofline).
    if "v6" in kind or "v7" in kind:
        return 4 * 1024 * 1024
    return 2 * 1024 * 1024


def _choose_tm(rows, itemsize, block_bytes):
    """Pick the row-tile size (static Python ints only)."""
    # dtype-aware sublane multiple: 8 for 4-byte, 16 for 2-byte, 32 for 1-byte.
    sub = max(8, 32 // max(1, itemsize))
    tm = max(sub, (block_bytes // (_LANES * itemsize)) // sub * sub)
    # Never ask for more rows than the (sublane-rounded) array has.
    rows_rounded = ((rows + sub - 1) // sub) * sub
    tm = min(tm, rows_rounded)
    # Guarantee >= 2 grid programs when possible: enables software pipelining
    # and lets both v7x TensorCores split the "parallel" axis.
    if tm >= rows and rows > sub:
        half = (((rows + 1) // 2) + sub - 1) // sub * sub
        if half < rows:
            tm = half
    return tm


def _htanh_kernel(x_ref, o_ref):
    # relu6(x) / 3 - 1  ==  clamp(x, 0, 6) * (1/3) - 1   (pure VPU work)
    x = x_ref[...].astype(jnp.float32)
    y = jnp.minimum(jnp.maximum(x, 0.0), 6.0) * (1.0 / 3.0) - 1.0
    o_ref[...] = y.astype(o_ref.dtype)


def htanh(x, *, block_bytes=None):
    """Elementwise HTanh: relu6(x) / 3 - 1, for any input shape/size."""
    orig_shape = x.shape
    orig_dtype = x.dtype
    n = x.size
    if n == 0:
        return x

    itemsize = jnp.dtype(orig_dtype).itemsize
    if block_bytes is None:
        block_bytes = _default_block_bytes()

    # --- lay the data out lane-dense: (rows, 128) ----------------------------
    xf = x.reshape(-1)
    rows = -(-n // _LANES)            # ceil(n / 128)
    pad = rows * _LANES - n           # <= 127 elements; 0 for 128-divisible n
    allow_fusion = None
    if pad:
        # Rare ragged path: pad only to the next lane boundary and let XLA
        # fuse the pad into the pallas_call input (no materialized copy).
        # TODO(synk): a fully pad/slice-free ragged path would mask the tail
        # inside the kernel instead.
        xf = jnp.pad(xf, (0, pad))
        allow_fusion = [True]
    x2 = xf.reshape(rows, _LANES)

    tm = _choose_tm(rows, itemsize, block_bytes)
    grid = (pl.cdiv(rows, tm),)       # boundary block is masked by Pallas

    out2 = pl.pallas_call(
        _htanh_kernel,
        out_shape=jax.ShapeDtypeStruct((rows, _LANES), orig_dtype),
        grid=grid,
        in_specs=[pl.BlockSpec((tm, _LANES), lambda i: (i, 0))],
        out_specs=pl.BlockSpec((tm, _LANES), lambda i: (i, 0)),
        compiler_params=pltpu.CompilerParams(
            dimension_semantics=("parallel",),
            allow_input_fusion=allow_fusion,
        ),
    )(x2)

    out = out2.reshape(-1)
    if pad:
        out = out[:n]
    return out.reshape(orig_shape)


if __name__ == "__main__":
    key = jax.random.PRNGKey(0)
    # NCHW-style image-like tensor; values spread across (<0, [0,6], >6)
    # regions so every branch of relu6 is exercised.
    x = jax.random.normal(key, (2, 4, 16, 16), jnp.float32) * 4.0

    fwd = jax.jit(htanh)
    y = fwd(x)
    jax.block_until_ready(y)

    # reference: F.relu6(x) / 3 - 1
    y_ref = jnp.clip(x, 0.0, 6.0) / 3.0 - 1.0

    assert y.shape == x.shape and y.dtype == x.dtype
    assert bool(jnp.all(jnp.isfinite(y)))
    assert bool(jnp.allclose(y, y_ref, atol=1e-6, rtol=1e-6))
    print("KERNEL_OK")
</pallas_src>

<mosaic_0001>
module attributes {stable_mosaic.version = 11 : i64} {
  func.func @_htanh_kernel(%arg0: i32, %arg1: memref<8x128xf32, #tpu.memory_space<vmem>>, %arg2: memref<8x128xf32, #tpu.memory_space<vmem>>) attributes {dimension_semantics = [#tpu.dimension_semantics<parallel>], iteration_bounds = array<i64: 2>, scalar_prefetch = 0 : i64, scratch_operands = 0 : i64, tpu.core_type = #tpu.core_type<tc>, window_params = [{transform_indices = @transform_0, window_bounds = array<i64: 8, 128>}, {transform_indices = @transform_1, window_bounds = array<i64: 8, 128>}]} {
    %c0 = arith.constant 0 : index
    %c0_0 = arith.constant 0 : index
    %0 = vector.load %arg1[%c0, %c0_0] : memref<8x128xf32, #tpu.memory_space<vmem>>, vector<8x128xf32>
    %cst = arith.constant 0.000000e+00 : f32
    %1 = vector.broadcast %cst : f32 to vector<8x128xf32>
    %2 = arith.maximumf %0, %1 : vector<8x128xf32>
    %cst_1 = arith.constant 6.000000e+00 : f32
    %3 = vector.broadcast %cst_1 : f32 to vector<8x128xf32>
    %4 = arith.minimumf %2, %3 : vector<8x128xf32>
    %cst_2 = arith.constant 0.333333343 : f32
    %5 = vector.broadcast %cst_2 : f32 to vector<8x128xf32>
    %6 = arith.mulf %4, %5 : vector<8x128xf32>
    %cst_3 = arith.constant 1.000000e+00 : f32
    %7 = vector.broadcast %cst_3 : f32 to vector<8x128xf32>
    %8 = arith.subf %6, %7 : vector<8x128xf32>
    %c0_4 = arith.constant 0 : index
    %c0_5 = arith.constant 0 : index
    %9 = vector.load %arg2[%c0_4, %c0_5] : memref<8x128xf32, #tpu.memory_space<vmem>>, vector<8x128xf32>
    tpu.vector_store %arg2[%c0_4, %c0_5], %8 {strides = array<i32>} : memref<8x128xf32, #tpu.memory_space<vmem>>, vector<8x128xf32>,
    return
  }
  func.func @transform_0(%arg0: i32) -> (i32, i32) {
    %c0_i32 = arith.constant 0 : i32
    %c0_i32_0 = arith.constant 0 : i32
    return %arg0, %c0_i32 : i32, i32
  }
  func.func @transform_1(%arg0: i32) -> (i32, i32) {
    %c0_i32 = arith.constant 0 : i32
    %c0_i32_0 = arith.constant 0 : i32
    return %arg0, %c0_i32 : i32, i32
  }
}

</mosaic_0001>

<llo_original>
// kernel: htanh.1
$region0: #{htanh.1}
  #allocation0 [shape = 'u32[]', space=smem, size = 0x4, offset = 0x4, fixed_abs, tag = 'smem constant byte address 0x4 - core index']
  #allocation1 [shape = 'u32[72,128]{1,0:T(1,128)}', space=vmem, size = 0x9000, scoped, tag = 'internal scratch']
  %s0 = inlined_call_operand.vmem [shape: f32[16,128], index: 0, kind: input, shape index: {}]
  %s1 = inlined_call_operand.vmem [shape: f32[16,128], index: 1, kind: output, shape index: {}]
  %s2 = sld [smem:[#allocation0]]
  $region37: #{htanh.1} parent=0
    _
  %s4 = ssub.s32 1, %s2
  %s5 = scalar_select 0, %s4, %s2
  loop: start=0, step=1, limit=4
  $region2: #{htanh.1} parent=0 // loop_pre_header
    _
  $region3: #{htanh.1} parent=0 // loop_header
    %s7 = sphi 0, %s11
    %p8 = scmp.ge.s32.totalorder %s7, 4
    %s17 = sphi 0, %s19
    %s20 = sphi 0, %s17
    %s21 = sphi 0, %s20
    %s37 = sphi 0, %s21
    %s43 = sphi 0, %s45
    %s46 = sphi 0, %s43
    %s47 = sphi 0, %s46
    %s63 = sphi 0, %s47
  $region4: #{htanh.1} parent=0 // loop_header_branch
    %10 = sbr.rel (%p8) target = $region8
  $region5: #{htanh.1} parent=0 // loop_body
    %s12 = ssub.s32 %s7, 1
    %s13 = ssub.s32 %s7, 2
    %s14 = sadd.s32 %s7, 1
    %s15 = ssub.s32 %s7, %s14
    %p16 = scmp.eq.s32.totalorder %s15, 0
    %s18 = sadd.s32 %s17, 1
    %s19 = scalar_select %p16, %s17, %s18
    %p22 = pneg %p16
    %p23 = scmp.eq.s32.totalorder %s7, 1
    %p24 = por %p22, %p23
    %p25 = scmp.ne.s32.totalorder %s17, %s20
    %p26 = scmp.eq.s32.totalorder %s7, 0
    %p27 = por %p25, %p26
    %p28 = scmp.ne.s32.totalorder %s17, %s20
    %p29 = scmp.eq.s32.totalorder %s12, 1
    %p30 = por %p28, %p29
    %p31 = scmp.ne.s32.totalorder %s20, %s21
    %p32 = scmp.eq.s32.totalorder %s12, 0
    %p33 = por %p31, %p32
    %p34 = scmp.ne.s32.totalorder %s20, %s21
    %p35 = scmp.eq.s32.totalorder %s13, 1
    %p36 = por %p34, %p35
    %p38 = scmp.ne.s32.totalorder %s21, %s37
    %p39 = scmp.eq.s32.totalorder %s13, 0
    %p40 = por %p38, %p39
    %s41 = ssub.s32 %s7, %s14
    %p42 = scmp.eq.s32.totalorder %s41, 0
    %s44 = sadd.s32 %s43, 1
    %s45 = scalar_select %p42, %s43, %s44
    %p48 = pneg %p42
    %p49 = scmp.eq.s32.totalorder %s7, 1
    %p50 = por %p48, %p49
    %p51 = scmp.ne.s32.totalorder %s43, %s46
    %p52 = scmp.eq.s32.totalorder %s7, 0
    %p53 = por %p51, %p52
    %p54 = scmp.ne.s32.totalorder %s43, %s46
    %p55 = scmp.eq.s32.totalorder %s12, 1
    %p56 = por %p54, %p55
    %p57 = scmp.ne.s32.totalorder %s46, %s47
    %p58 = scmp.eq.s32.totalorder %s12, 0
    %p59 = por %p57, %p58
    %p60 = scmp.ne.s32.totalorder %s46, %s47
    %p61 = scmp.eq.s32.totalorder %s13, 1
    %p62 = por %p60, %p61
    %p64 = scmp.ne.s32.totalorder %s47, %s63
    %p65 = scmp.eq.s32.totalorder %s13, 0
    %p66 = por %p64, %p65
    %p67 = scmp.le.s32.totalorder 1, %s7
    %p68 = scmp.lt.s32.totalorder %s7, 3
    %p69 = pnand %p67, %p68
    %p70 = pneg %p69
    // Predicated region
    $region9: #{htanh.1} parent=5 // pred_check
      _
    $region10: #{htanh.1} parent=5 // pred_check_branch
      %72 = sbr.rel (%p69) target = $region12
    $region11: #{htanh.1} parent=5 // pred_region
      %s73 = ssub.s32 %s7, 1
    $region12: #{htanh.1} parent=5 // pred_fallthru
      _
    %p74 = scmp.lt.s32.totalorder %s7, 2
    // Predicated region
    $region13: #{htanh.1} parent=5 // pred_check
      %p75 = pneg %p74
    $region14: #{htanh.1} parent=5 // pred_check_branch
      %77 = sbr.rel (%p75) target = $region16
    $region15: #{htanh.1} parent=5 // pred_region
      // Predicated region
      $region17: #{htanh.1} parent=15 // pred_check
        %p78 = pneg %p27
      $region18: #{htanh.1} parent=15 // pred_check_branch
        %80 = sbr.rel (%p78) target = $region20
      $region19: #{htanh.1} parent=15 // pred_region
        %p81 = scmp.lt.s32.totalorder %s7, 1
        %s82 = scalar_select %p81, %s7, 1
        %s83 = smul.addr %s82, 8
        %s84 = scalar_lea.vmem %s0, %s83
      $region20: #{htanh.1} parent=15 // pred_fallthru
        _
    $region16: #{htanh.1} parent=5 // pred_fallthru
      _
    %p85 = scmp.le.s32.totalorder 1, %s7
    %p86 = scmp.lt.s32.totalorder %s7, 3
    %p87 = pnand %p85, %p86
    %p88 = pneg %p87
    // Predicated region
    $region21: #{htanh.1} parent=5 // pred_check
      _
    $region22: #{htanh.1} parent=5 // pred_check_branch
      %90 = sbr.rel (%p87) target = $region24
    $region23: #{htanh.1} parent=5 // pred_region
      %s91 = ssub.s32 %s7, 1
      %p92 = scmp.lt.s32.totalorder %s12, 1
      %s93 = scalar_select %p92, %s12, 1
      %s94 = smul.addr %s93, 8
      %s95 = scalar_lea.vmem %s0, %s94
      %p96 = pneg %p33
      %p97 = pneg %p30
      %p98 = pneg %p59
      %p99 = pneg %p56
      %p100 = scmp.lt.s32.totalorder %s12, 1
      %s101 = scalar_select %p100, %s12, 1
      %s102 = smul.addr %s101, 8
      %s103 = scalar_lea.vmem %s1, %s102
      %p104 = scmp.lt.s32.totalorder %s12, 1
      %s105 = scalar_select %p104, %s12, 1
      %s106 = smul.addr %s105, 8
      %s107 = scalar_lea.vmem %s0, %s106
      %p108 = scmp.lt.s32.totalorder %s12, 1
      %s109 = scalar_select %p108, %s12, 1
      %s110 = smul.addr %s109, 8
      %s111 = scalar_lea.vmem %s1, %s110
      %v112 = vld [vmem:[%s107] sm:$0xff]
      %v113 = vmax.f32 %v112, 0.0
      %v114 = vmin.f32 %v113, 6.0
      %v115 = vmul.f32 %v114, 0.33333334
      %v116 = vsub.f32 %v115, 1.0
      %117 = vst [vmem:[%s111] sm:$0xff] %v116
      %p118 = scmp.lt.s32.totalorder %s12, 1
      %s119 = scalar_select %p118, %s12, 1
      %s120 = smul.addr %s119, 8
      %s121 = scalar_lea.vmem %s1, %s120
      // Predicated region
      $region25: #{htanh.1} parent=23 // pred_check
        %p122 = pneg %p56
      $region26: #{htanh.1} parent=23 // pred_check_branch
        %124 = sbr.rel (%p122) target = $region28
      $region27: #{htanh.1} parent=23 // pred_region
        _
      $region28: #{htanh.1} parent=23 // pred_fallthru
        _
    $region24: #{htanh.1} parent=5 // pred_fallthru
      _
    %p125 = scmp.le.s32.totalorder 2, %s7
    // Predicated region
    $region29: #{htanh.1} parent=5 // pred_check
      %p126 = pneg %p125
    $region30: #{htanh.1} parent=5 // pred_check_branch
      %128 = sbr.rel (%p126) target = $region32
    $region31: #{htanh.1} parent=5 // pred_region
      %s129 = ssub.s32 %s7, 2
      // Predicated region
      $region33: #{htanh.1} parent=31 // pred_check
        %p130 = pneg %p62
      $region34: #{htanh.1} parent=31 // pred_check_branch
        %132 = sbr.rel (%p130) target = $region36
      $region35: #{htanh.1} parent=31 // pred_region
        %p133 = scmp.lt.s32.totalorder %s13, 1
        %s134 = scalar_select %p133, %s13, 1
        %s135 = smul.addr %s134, 8
        %s136 = scalar_lea.vmem %s1, %s135
      $region36: #{htanh.1} parent=31 // pred_fallthru
        _
    $region32: #{htanh.1} parent=5 // pred_fallthru
      _
  $region6: #{htanh.1} parent=0 // loop_footer
    %s11 = sadd.s32 1, %s7
  $region7: #{htanh.1} parent=0 // loop_footer_branch
    %6 = sbr.rel target = $region3
  $region8: #{htanh.1} parent=0 // loop_exit
    _

</llo_original>
